<compile_context>
chip_gen: v5e
topology: v5e:2x2
jax: 0.10.0
libtpu: 0.0.40
codegen_flags: <defaults>
</compile_context>

<pallas_src>
import functools

import jax
import jax.numpy as jnp
from jax.experimental import pallas as pl
from jax.experimental.pallas import tpu as pltpu

_LANE = 128


def _round_up(n, m):
    return (n + m - 1) // m * m


def _fused_head_kernel(x_ref, w_ref, b_ref, out_ref):
    # Per-tile f32 -> bf16 cast (VPU work, hidden under the MXU matmul).
    x_bf = x_ref[...].astype(jnp.bfloat16)
    # One MXU matmul per grid step: (tile_n, C) bf16 @ (C, W_pad) bf16 -> f32.
    acc = jnp.dot(x_bf, w_ref[...], preferred_element_type=jnp.float32)
    # Bias add in f32; W_pad % 128 == 0 -> lane-dense unmasked store.
    out_ref[...] = (acc + b_ref[...]).astype(out_ref.dtype)


def prepare_fastrcnn_head_params(w_cls, b_cls, w_bbox, b_bbox):
    """One-time parameter prep (outside the per-call hot path).

    w_cls  : (K, C)    b_cls  : (K,)      -- PyTorch nn.Linear layout
    w_bbox : (4K, C)   b_bbox : (4K,)
    Returns (w_fused bf16 (C, W_pad), b_fused f32 (1, W_pad), K, K4).
    """
    K, _ = w_cls.shape
    K4 = w_bbox.shape[0]
    W = K + K4
    W_pad = _round_up(W, _LANE)

    w_fused = jnp.concatenate([w_cls, w_bbox], axis=0).T          # (C, K+4K)
    w_fused = jnp.pad(w_fused, ((0, 0), (0, W_pad - W)))
    b_fused = jnp.concatenate([b_cls, b_bbox])                    # (K+4K,)
    b_fused = jnp.pad(b_fused, (0, W_pad - W)).reshape(1, W_pad)

    return (w_fused.astype(jnp.bfloat16),
            b_fused.astype(jnp.float32),
            int(K), int(K4))


@functools.partial(jax.jit, static_argnames=("K", "K4", "tile_n"))
def fastrcnn_predictor(x, w_fused, b_fused, K, K4, *, tile_n=512):
    """
    x        : (N, C) or (N, C, 1, 1) f32 pooled RoI features
    w_fused  : (C, W_pad) bf16   from prepare_fastrcnn_head_params
    b_fused  : (1, W_pad) f32
    Returns (scores (N, K) f32, bbox_deltas (N, 4K) f32).
    """
    if x.ndim == 4:
        assert x.shape[2] == 1 and x.shape[3] == 1
    x = x.reshape(x.shape[0], -1)                                  # flatten(1)

    N, C = x.shape
    W_pad = w_fused.shape[1]

    # Row tile: multiple of 16 (bf16 sublane packing), as large as useful for
    # this mem-bound kernel, never usefully larger than round_up(N, 16).
    tile_n = _round_up(max(16, min(tile_n, N)), 16)
    n_tiles = pl.cdiv(N, tile_n)
    # v7x megacore: an odd tile count > 1 gives an imbalanced 2-TC split;
    # re-pick tile_n so the split is even.  (Tiny N -> single step, single TC.)
    if n_tiles > 1 and n_tiles % 2 == 1:
        tile_n = _round_up(pl.cdiv(N, n_tiles + 1), 16)
        n_tiles = pl.cdiv(N, tile_n)

    out = pl.pallas_call(
        _fused_head_kernel,
        out_shape=jax.ShapeDtypeStruct((N, W_pad), jnp.float32),
        grid=(n_tiles,),
        in_specs=[
            pl.BlockSpec((tile_n, C), lambda i: (i, 0)),           # x row tiles
            # TODO(synk): if C grows (e.g. 1024 representation size), add
            # pipeline_mode=pl.Buffered(1) on W/b specs (constant index_map
            # blocks don't need double buffers).
            pl.BlockSpec((C, W_pad), lambda i: (0, 0)),            # resident W
            pl.BlockSpec((1, W_pad), lambda i: (0, 0)),            # resident b
        ],
        out_specs=pl.BlockSpec((tile_n, W_pad), lambda i: (i, 0)),
        compiler_params=pltpu.CompilerParams(
            dimension_semantics=("parallel",),   # RoI tiles split across TCs
        ),
    )(x, w_fused, b_fused)

    # Split the fused lane-dense slab; under this jit the slices fuse with
    # downstream consumers instead of extra standalone HBM passes.
    scores = out[:, :K]
    bbox_deltas = out[:, K:K + K4]
    return scores, bbox_deltas


def _init_params(key, in_channels, num_classes):
    # Deterministic synthetic init (mimics nn.Linear: U(-1/sqrt(C), 1/sqrt(C))).
    k1, k2, k3, k4 = jax.random.split(key, 4)
    bound = 1.0 / float(in_channels) ** 0.5
    w_cls = jax.random.uniform(k1, (num_classes, in_channels), jnp.float32,
                               -bound, bound)
    b_cls = jax.random.uniform(k2, (num_classes,), jnp.float32, -bound, bound)
    w_bbox = jax.random.uniform(k3, (num_classes * 4, in_channels), jnp.float32,
                                -bound, bound)
    b_bbox = jax.random.uniform(k4, (num_classes * 4,), jnp.float32,
                                -bound, bound)
    return w_cls, b_cls, w_bbox, b_bbox


if __name__ == "__main__":
    key = jax.random.PRNGKey(0)
    kx, kp = jax.random.split(key)

    # Small but realistic head shapes: 300 RoIs x 256 channels, 8 classes.
    N, C = 300, 256
    num_classes = 8

    # Box-head output as NCHW (N, C, 1, 1).
    x = jax.random.normal(kx, (N, C, 1, 1), jnp.float32)
    w_cls, b_cls, w_bbox, b_bbox = _init_params(kp, C, num_classes)

    # One-time parameter preparation (fuse + transpose + pad + bf16 cast).
    w_fused, b_fused, K, K4 = prepare_fastrcnn_head_params(
        w_cls, b_cls, w_bbox, b_bbox)

    scores, bbox_deltas = fastrcnn_predictor(x, w_fused, b_fused, K=K, K4=K4)
    jax.block_until_ready((scores, bbox_deltas))

    # Reference check in plain JAX (f32); loose tolerance for the bf16 matmul.
    xf = x.reshape(N, -1)
    ref_scores = xf @ w_cls.T + b_cls
    ref_bbox = xf @ w_bbox.T + b_bbox
    assert scores.shape == (N, num_classes)
    assert bbox_deltas.shape == (N, num_classes * 4)
    assert jnp.allclose(scores, ref_scores, rtol=2e-2, atol=2e-2)
    assert jnp.allclose(bbox_deltas, ref_bbox, rtol=2e-2, atol=2e-2)

    print("KERNEL_OK")
</pallas_src>

<mosaic_0001>
module attributes {stable_mosaic.version = 11 : i64} {
  func.func @_fused_head_kernel(%arg0: i32, %arg1: memref<304x256xf32, #tpu.memory_space<vmem>>, %arg2: memref<256x128xbf16, #tpu.memory_space<vmem>>, %arg3: memref<1x128xf32, #tpu.memory_space<vmem>>, %arg4: memref<304x128xf32, #tpu.memory_space<vmem>>) attributes {dimension_semantics = [#tpu.dimension_semantics<parallel>], iteration_bounds = array<i64: 1>, scalar_prefetch = 0 : i64, scratch_operands = 0 : i64, tpu.core_type = #tpu.core_type<tc>, window_params = [{transform_indices = @transform_0, window_bounds = array<i64: 304, 256>}, {pipeline_mode = #tpu.pipeline_mode<synchronous>, transform_indices = @transform_1, window_bounds = array<i64: 256, 128>}, {pipeline_mode = #tpu.pipeline_mode<synchronous>, transform_indices = @transform_2, window_bounds = array<i64: 1, 128>}, {transform_indices = @transform_3, window_bounds = array<i64: 304, 128>}]} {
    %c0 = arith.constant 0 : index
    %c0_0 = arith.constant 0 : index
    %0 = vector.load %arg1[%c0, %c0_0] : memref<304x256xf32, #tpu.memory_space<vmem>>, vector<304x256xf32>
    %1 = arith.truncf %0 : vector<304x256xf32> to vector<304x256xbf16>
    %c0_1 = arith.constant 0 : index
    %c0_2 = arith.constant 0 : index
    %2 = vector.load %arg2[%c0_1, %c0_2] : memref<256x128xbf16, #tpu.memory_space<vmem>>, vector<256x128xbf16>
    %cst = arith.constant dense<0.000000e+00> : vector<304x128xf32>
    %3 = tpu.matmul %1, %2, %cst {dimension_numbers = #tpu.dot_dimension_numbers<[1], [0], [0], [1], [0, 0, 1, 1], [], []>} : vector<304x256xbf16>, vector<256x128xbf16>, vector<304x128xf32> -> vector<304x128xf32>
    %c0_3 = arith.constant 0 : index
    %c0_4 = arith.constant 0 : index
    %4 = vector.load %arg3[%c0_3, %c0_4] : memref<1x128xf32, #tpu.memory_space<vmem>>, vector<1x128xf32>
    %5 = vector.broadcast %4 : vector<1x128xf32> to vector<304x128xf32>
    %6 = arith.addf %3, %5 : vector<304x128xf32>
    %c0_5 = arith.constant 0 : index
    %c0_6 = arith.constant 0 : index
    %7 = vector.load %arg4[%c0_5, %c0_6] : memref<304x128xf32, #tpu.memory_space<vmem>>, vector<304x128xf32>
    tpu.vector_store %arg4[%c0_5, %c0_6], %6 {strides = array<i32>} : memref<304x128xf32, #tpu.memory_space<vmem>>, vector<304x128xf32>,
    return
  }
  func.func @transform_0(%arg0: i32) -> (i32, i32) {
    %c0_i32 = arith.constant 0 : i32
    %c0_i32_0 = arith.constant 0 : i32
    return %arg0, %c0_i32 : i32, i32
  }
  func.func @transform_1(%arg0: i32) -> (i32, i32) {
    %c0_i32 = arith.constant 0 : i32
    %c0_i32_0 = arith.constant 0 : i32
    %c0_i32_1 = arith.constant 0 : i32
    return %c0_i32, %c0_i32_0 : i32, i32
  }
  func.func @transform_2(%arg0: i32) -> (i32, i32) {
    %c0_i32 = arith.constant 0 : i32
    %c0_i32_0 = arith.constant 0 : i32
    %c0_i32_1 = arith.constant 0 : i32
    return %c0_i32, %c0_i32_0 : i32, i32
  }
  func.func @transform_3(%arg0: i32) -> (i32, i32) {
    %c0_i32 = arith.constant 0 : i32
    %c0_i32_0 = arith.constant 0 : i32
    return %arg0, %c0_i32 : i32, i32
  }
}

</mosaic_0001>

<llo_original>
// kernel: fastrcnn_predictor.1
$region0: #{fastrcnn_predictor.1}
  #allocation0 [shape = 'u32[]', space=smem, size = 0x4, offset = 0x4, fixed_abs, tag = 'smem constant byte address 0x4 - core index']
  #allocation1 [shape = 'u32[72,128]{1,0:T(1,128)}', space=vmem, size = 0x9000, scoped, tag = 'internal scratch']
  %s0 = inlined_call_operand.vmem [shape: f32[300,256], index: 0, kind: input, shape index: {}]
  %s1 = inlined_call_operand.vmem [shape: bf16[256,128], index: 1, kind: input, shape index: {}]
  %s2 = inlined_call_operand.vmem [shape: f32[1,128], index: 2, kind: input, shape index: {}]
  %s3 = inlined_call_operand.vmem [shape: f32[300,128], index: 3, kind: output, shape index: {}]
  %s4 = sld [smem:[#allocation0]]
  $region22: #{fastrcnn_predictor.1} parent=0
    _
  %s6 = ssub.s32 1, %s4
  %s7 = scalar_select 0, %s6, %s4
  // Predicated region
  $region2: #{fastrcnn_predictor.1} parent=0 // pred_check
    _
  $region3: #{fastrcnn_predictor.1} parent=0 // pred_check_branch
    %9 = sbr.rel (0) target = $region5
  $region4: #{fastrcnn_predictor.1} parent=0 // pred_region
    _
  $region5: #{fastrcnn_predictor.1} parent=0 // pred_fallthru
    _
  // Predicated region
  $region6: #{fastrcnn_predictor.1} parent=0 // pred_check
    _
  $region7: #{fastrcnn_predictor.1} parent=0 // pred_check_branch
    %11 = sbr.rel (0) target = $region9
  $region8: #{fastrcnn_predictor.1} parent=0 // pred_region
    _
  $region9: #{fastrcnn_predictor.1} parent=0 // pred_fallthru
    _
  // Predicated region
  $region10: #{fastrcnn_predictor.1} parent=0 // pred_check
    _
  $region11: #{fastrcnn_predictor.1} parent=0 // pred_check_branch
    %13 = sbr.rel (0) target = $region13
  $region12: #{fastrcnn_predictor.1} parent=0 // pred_region
    _
  $region13: #{fastrcnn_predictor.1} parent=0 // pred_fallthru
    _
  %v14 = vld [vmem:[%s0] sm:$0xff]
  %v15 = vld [vmem:[%s0 + $0x8] sm:$0xff]
  %v16 = vld [vmem:[%s0 + $0x10] sm:$0xff]
  %v17 = vld [vmem:[%s0 + $0x18] sm:$0xff]
  %v18 = vld [vmem:[%s0 + $0x20] sm:$0xff]
  %v19 = vld [vmem:[%s0 + $0x28] sm:$0xff]
  %v20 = vld [vmem:[%s0 + $0x30] sm:$0xff]
  %v21 = vld [vmem:[%s0 + $0x38] sm:$0xff]
  %v22 = vld [vmem:[%s0 + $0x40] sm:$0xff]
  %v23 = vld [vmem:[%s0 + $0x48] sm:$0xff]
  %v24 = vld [vmem:[%s0 + $0x50] sm:$0xff]
  %v25 = vld [vmem:[%s0 + $0x58] sm:$0xff]
  %v26 = vld [vmem:[%s0 + $0x60] sm:$0xff]
  %v27 = vld [vmem:[%s0 + $0x68] sm:$0xff]
  %v28 = vld [vmem:[%s0 + $0x70] sm:$0xff]
  %v29 = vld [vmem:[%s0 + $0x78] sm:$0xff]
  %v30 = vld [vmem:[%s0 + $0x80] sm:$0xff]
  %v31 = vld [vmem:[%s0 + $0x88] sm:$0xff]
  %v32 = vld [vmem:[%s0 + $0x90] sm:$0xff]
  %v33 = vld [vmem:[%s0 + $0x98] sm:$0xff]
  %v34 = vld [vmem:[%s0 + $0xa0] sm:$0xff]
  %v35 = vld [vmem:[%s0 + $0xa8] sm:$0xff]
  %v36 = vld [vmem:[%s0 + $0xb0] sm:$0xff]
  %v37 = vld [vmem:[%s0 + $0xb8] sm:$0xff]
  %v38 = vld [vmem:[%s0 + $0xc0] sm:$0xff]
  %v39 = vld [vmem:[%s0 + $0xc8] sm:$0xff]
  %v40 = vld [vmem:[%s0 + $0xd0] sm:$0xff]
  %v41 = vld [vmem:[%s0 + $0xd8] sm:$0xff]
  %v42 = vld [vmem:[%s0 + $0xe0] sm:$0xff]
  %v43 = vld [vmem:[%s0 + $0xe8] sm:$0xff]
  %v44 = vld [vmem:[%s0 + $0xf0] sm:$0xff]
  %v45 = vld [vmem:[%s0 + $0xf8] sm:$0xff]
  %v46 = vld [vmem:[%s0 + $0x100] sm:$0xff]
  %v47 = vld [vmem:[%s0 + $0x108] sm:$0xff]
  %v48 = vld [vmem:[%s0 + $0x110] sm:$0xff]
  %v49 = vld [vmem:[%s0 + $0x118] sm:$0xff]
  %v50 = vld [vmem:[%s0 + $0x120] sm:$0xff]
  %v51 = vld [vmem:[%s0 + $0x128] sm:$0xff]
  %v52 = vld [vmem:[%s0 + $0x130] sm:$0xff]
  %v53 = vld [vmem:[%s0 + $0x138] sm:$0xff]
  %v54 = vld [vmem:[%s0 + $0x140] sm:$0xff]
  %v55 = vld [vmem:[%s0 + $0x148] sm:$0xff]
  %v56 = vld [vmem:[%s0 + $0x150] sm:$0xff]
  %v57 = vld [vmem:[%s0 + $0x158] sm:$0xff]
  %v58 = vld [vmem:[%s0 + $0x160] sm:$0xff]
  %v59 = vld [vmem:[%s0 + $0x168] sm:$0xff]
  %v60 = vld [vmem:[%s0 + $0x170] sm:$0xff]
  %v61 = vld [vmem:[%s0 + $0x178] sm:$0xff]
  %v62 = vld [vmem:[%s0 + $0x180] sm:$0xff]
  %v63 = vld [vmem:[%s0 + $0x188] sm:$0xff]
  %v64 = vld [vmem:[%s0 + $0x190] sm:$0xff]
  %v65 = vld [vmem:[%s0 + $0x198] sm:$0xff]
  %v66 = vld [vmem:[%s0 + $0x1a0] sm:$0xff]
  %v67 = vld [vmem:[%s0 + $0x1a8] sm:$0xff]
  %v68 = vld [vmem:[%s0 + $0x1b0] sm:$0xff]
  %v69 = vld [vmem:[%s0 + $0x1b8] sm:$0xff]
  %v70 = vld [vmem:[%s0 + $0x1c0] sm:$0xff]
  %v71 = vld [vmem:[%s0 + $0x1c8] sm:$0xff]
  %v72 = vld [vmem:[%s0 + $0x1d0] sm:$0xff]
  %v73 = vld [vmem:[%s0 + $0x1d8] sm:$0xff]
  %v74 = vld [vmem:[%s0 + $0x1e0] sm:$0xff]
  %v75 = vld [vmem:[%s0 + $0x1e8] sm:$0xff]
  %v76 = vld [vmem:[%s0 + $0x1f0] sm:$0xff]
  %v77 = vld [vmem:[%s0 + $0x1f8] sm:$0xff]
  %v78 = vld [vmem:[%s0 + $0x200] sm:$0xff]
  %v79 = vld [vmem:[%s0 + $0x208] sm:$0xff]
  %v80 = vld [vmem:[%s0 + $0x210] sm:$0xff]
  %v81 = vld [vmem:[%s0 + $0x218] sm:$0xff]
  %v82 = vld [vmem:[%s0 + $0x220] sm:$0xff]
  %v83 = vld [vmem:[%s0 + $0x228] sm:$0xff]
  %v84 = vld [vmem:[%s0 + $0x230] sm:$0xff]
  %v85 = vld [vmem:[%s0 + $0x238] sm:$0xff]
  %v86 = vld [vmem:[%s0 + $0x240] sm:$0xff]
  %v87 = vld [vmem:[%s0 + $0x248] sm:$0xff]
  %v88 = vld [vmem:[%s0 + $0x250] sm:$0xff]
  %v89 = vld [vmem:[%s0 + $0x258] sm:$0xff]
  %v90 = vpack.c.bf16 %v16, %v14
  %v91 = vpack.c.bf16 %v17, %v15
  %v92 = vpack.c.bf16 %v20, %v18
  %v93 = vpack.c.bf16 %v21, %v19
  %v94 = vpack.c.bf16 %v24, %v22
  %v95 = vpack.c.bf16 %v25, %v23
  %v96 = vpack.c.bf16 %v28, %v26
  %v97 = vpack.c.bf16 %v29, %v27
  %v98 = vpack.c.bf16 %v32, %v30
  %v99 = vpack.c.bf16 %v33, %v31
  %v100 = vpack.c.bf16 %v36, %v34
  %v101 = vpack.c.bf16 %v37, %v35
  %v102 = vpack.c.bf16 %v40, %v38
  %v103 = vpack.c.bf16 %v41, %v39
  %v104 = vpack.c.bf16 %v44, %v42
  %v105 = vpack.c.bf16 %v45, %v43
  %v106 = vpack.c.bf16 %v48, %v46
  %v107 = vpack.c.bf16 %v49, %v47
  %v108 = vpack.c.bf16 %v52, %v50
  %v109 = vpack.c.bf16 %v53, %v51
  %v110 = vpack.c.bf16 %v56, %v54
  %v111 = vpack.c.bf16 %v57, %v55
  %v112 = vpack.c.bf16 %v60, %v58
  %v113 = vpack.c.bf16 %v61, %v59
  %v114 = vpack.c.bf16 %v64, %v62
  %v115 = vpack.c.bf16 %v65, %v63
  %v116 = vpack.c.bf16 %v68, %v66
  %v117 = vpack.c.bf16 %v69, %v67
  %v118 = vpack.c.bf16 %v72, %v70
  %v119 = vpack.c.bf16 %v73, %v71
  %v120 = vpack.c.bf16 %v76, %v74
  %v121 = vpack.c.bf16 %v77, %v75
  %v122 = vpack.c.bf16 %v80, %v78
  %v123 = vpack.c.bf16 %v81, %v79
  %v124 = vpack.c.bf16 %v84, %v82
  %v125 = vpack.c.bf16 %v85, %v83
  %v126 = vpack.c.bf16 %v88, %v86
  %v127 = vpack.c.bf16 %v89, %v87
  %v128 = vld [vmem:[%s1] sm:$0xf]
  %v129 = vld [vmem:[%s1 + $0x4] sm:$0xf]
  %v130 = vld [vmem:[%s1 + $0x8] sm:$0xf]
  %v131 = vld [vmem:[%s1 + $0xc] sm:$0xf]
  %v132 = vld [vmem:[%s1 + $0x10] sm:$0xf]
  %v133 = vld [vmem:[%s1 + $0x14] sm:$0xf]
  %v134 = vld [vmem:[%s1 + $0x18] sm:$0xf]
  %v135 = vld [vmem:[%s1 + $0x1c] sm:$0xf]
  %v136 = vld [vmem:[%s1 + $0x20] sm:$0xf]
  %v137 = vld [vmem:[%s1 + $0x24] sm:$0xf]
  %v138 = vld [vmem:[%s1 + $0x28] sm:$0xf]
  %v139 = vld [vmem:[%s1 + $0x2c] sm:$0xf]
  %v140 = vld [vmem:[%s1 + $0x30] sm:$0xf]
  %v141 = vld [vmem:[%s1 + $0x34] sm:$0xf]
  %v142 = vld [vmem:[%s1 + $0x38] sm:$0xf]
  %v143 = vld [vmem:[%s1 + $0x3c] sm:$0xf]
  %v144 = vld [vmem:[%s1 + $0x40] sm:$0xf]
  %v145 = vld [vmem:[%s1 + $0x44] sm:$0xf]
  %v146 = vld [vmem:[%s1 + $0x48] sm:$0xf]
  %v147 = vld [vmem:[%s1 + $0x4c] sm:$0xf]
  %v148 = vld [vmem:[%s1 + $0x50] sm:$0xf]
  %v149 = vld [vmem:[%s1 + $0x54] sm:$0xf]
  %v150 = vld [vmem:[%s1 + $0x58] sm:$0xf]
  %v151 = vld [vmem:[%s1 + $0x5c] sm:$0xf]
  %v152 = vld [vmem:[%s1 + $0x60] sm:$0xf]
  %v153 = vld [vmem:[%s1 + $0x64] sm:$0xf]
  %v154 = vld [vmem:[%s1 + $0x68] sm:$0xf]
  %v155 = vld [vmem:[%s1 + $0x6c] sm:$0xf]
  %v156 = vld [vmem:[%s1 + $0x70] sm:$0xf]
  %v157 = vld [vmem:[%s1 + $0x74] sm:$0xf]
  %v158 = vld [vmem:[%s1 + $0x78] sm:$0xf]
  %v159 = vld [vmem:[%s1 + $0x7c] sm:$0xf]
  %v160 = vld [vmem:[%s2] sm:$0x1]
  %v162 = vperm.slane %v160, 0
  %v196 = vunpack.c.l.b16 %v128
  %v197 = vunpack.c.l.b16 %v129
  %v198 = vunpack.c.l.b16 %v130
  %v199 = vunpack.c.l.b16 %v131
  %v200 = vunpack.c.l.b16 %v132
  %v201 = vunpack.c.l.b16 %v133
  %v202 = vunpack.c.l.b16 %v134
  %v203 = vunpack.c.l.b16 %v135
  %v204 = vunpack.c.l.b16 %v136
  %v205 = vunpack.c.l.b16 %v137
  %v206 = vunpack.c.l.b16 %v138
  %v207 = vunpack.c.l.b16 %v139
  %v208 = vunpack.c.l.b16 %v140
  %v209 = vunpack.c.l.b16 %v141
  %v210 = vunpack.c.l.b16 %v142
  %v211 = vunpack.c.l.b16 %v143
  %v212 = vunpack.c.l.b16 %v144
  %v213 = vunpack.c.l.b16 %v145
  %v214 = vunpack.c.l.b16 %v146
  %v215 = vunpack.c.l.b16 %v147
  %v216 = vunpack.c.l.b16 %v148
  %v217 = vunpack.c.l.b16 %v149
  %v218 = vunpack.c.l.b16 %v150
  %v219 = vunpack.c.l.b16 %v151
  %v220 = vunpack.c.l.b16 %v152
  %v221 = vunpack.c.l.b16 %v153
  %v222 = vunpack.c.l.b16 %v154
  %v223 = vunpack.c.l.b16 %v155
  %v224 = vunpack.c.l.b16 %v156
  %v225 = vunpack.c.l.b16 %v157
  %v226 = vunpack.c.l.b16 %v158
  %v227 = vunpack.c.l.b16 %v159
  %v228 = vpack.c.b16 %v197, %v196
  %v229 = vpack.c.b16 %v199, %v198
  %v230 = vpack.c.b16 %v201, %v200
  %v231 = vpack.c.b16 %v203, %v202
  %v232 = vpack.c.b16 %v205, %v204
  %v233 = vpack.c.b16 %v207, %v206
  %v234 = vpack.c.b16 %v209, %v208
  %v235 = vpack.c.b16 %v211, %v210
  %v236 = vpack.c.b16 %v213, %v212
  %v237 = vpack.c.b16 %v215, %v214
  %v238 = vpack.c.b16 %v217, %v216
  %v239 = vpack.c.b16 %v219, %v218
  %v240 = vpack.c.b16 %v221, %v220
  %v241 = vpack.c.b16 %v223, %v222
  %v242 = vpack.c.b16 %v225, %v224
  %v243 = vpack.c.b16 %v227, %v226
  %260 = vmatpush.bf16.msra.mxu0 %v235
  %261 = vmatpush.bf16.msra.mxu0 %v234
  %262 = vmatpush.bf16.msra.mxu0 %v233
  %263 = vmatpush.bf16.msra.mxu0 %v232
  %264 = vmatpush.bf16.msra.mxu0 %v231
  %265 = vmatpush.bf16.msra.mxu0 %v230
  %266 = vmatpush.bf16.msra.mxu0 %v229
  %267 = vmatpush.bf16.msra.mxu0 %v228
  %268 = vmatmul.bf16.gmra.mxu0 %v90
  %v269 = vpop.f32.mrf.mxu0
  %v270 = vadd.f32 %v162, %v269
  %v271 = vpop.f32.mrf.mxu0
  %v272 = vadd.f32 %v162, %v271
  %273 = vmatmul.bf16.gmra.mxu0 %v92
  %v274 = vpop.f32.mrf.mxu0
  %v275 = vadd.f32 %v162, %v274
  %v276 = vpop.f32.mrf.mxu0
  %v277 = vadd.f32 %v162, %v276
  %278 = vmatmul.bf16.gmra.mxu0 %v94
  %v279 = vpop.f32.mrf.mxu0
  %v280 = vadd.f32 %v162, %v279
  %v281 = vpop.f32.mrf.mxu0
  %v282 = vadd.f32 %v162, %v281
  %283 = vmatmul.bf16.gmra.mxu0 %v96
  %v284 = vpop.f32.mrf.mxu0
  %v285 = vadd.f32 %v162, %v284
  %v286 = vpop.f32.mrf.mxu0
  %v287 = vadd.f32 %v162, %v286
  %288 = vmatmul.bf16.gmra.mxu0 %v98
  %v289 = vpop.f32.mrf.mxu0
  %v290 = vadd.f32 %v162, %v289
  %v291 = vpop.f32.mrf.mxu0
  %v292 = vadd.f32 %v162, %v291
  %293 = vmatmul.bf16.gmra.mxu0 %v100
  %v294 = vpop.f32.mrf.mxu0
  %v295 = vadd.f32 %v162, %v294
  %v296 = vpop.f32.mrf.mxu0
  %v297 = vadd.f32 %v162, %v296
  %298 = vmatmul.bf16.gmra.mxu0 %v102
  %v299 = vpop.f32.mrf.mxu0
  %v300 = vadd.f32 %v162, %v299
  %v301 = vpop.f32.mrf.mxu0
  %v302 = vadd.f32 %v162, %v301
  %303 = vmatmul.bf16.gmra.mxu0 %v104
  %v304 = vpop.f32.mrf.mxu0
  %v305 = vadd.f32 %v162, %v304
  %v306 = vpop.f32.mrf.mxu0
  %v307 = vadd.f32 %v162, %v306
  %308 = vmatmul.bf16.gmra.mxu0 %v106
  %v309 = vpop.f32.mrf.mxu0
  %v310 = vadd.f32 %v162, %v309
  %v311 = vpop.f32.mrf.mxu0
  %v312 = vadd.f32 %v162, %v311
  %313 = vmatmul.bf16.gmra.mxu0 %v108
  %v314 = vpop.f32.mrf.mxu0
  %v315 = vadd.f32 %v162, %v314
  %v316 = vpop.f32.mrf.mxu0
  %v317 = vadd.f32 %v162, %v316
  %318 = vmatmul.bf16.gmra.mxu0 %v110
  %v319 = vpop.f32.mrf.mxu0
  %v320 = vadd.f32 %v162, %v319
  %v321 = vpop.f32.mrf.mxu0
  %v322 = vadd.f32 %v162, %v321
  %323 = vmatmul.bf16.gmra.mxu0 %v112
  %v324 = vpop.f32.mrf.mxu0
  %v325 = vadd.f32 %v162, %v324
  %v326 = vpop.f32.mrf.mxu0
  %v327 = vadd.f32 %v162, %v326
  %328 = vmatmul.bf16.gmra.mxu0 %v114
  %v329 = vpop.f32.mrf.mxu0
  %v330 = vadd.f32 %v162, %v329
  %v331 = vpop.f32.mrf.mxu0
  %v332 = vadd.f32 %v162, %v331
  %333 = vmatmul.bf16.gmra.mxu0 %v116
  %v334 = vpop.f32.mrf.mxu0
  %v335 = vadd.f32 %v162, %v334
  %v336 = vpop.f32.mrf.mxu0
  %v337 = vadd.f32 %v162, %v336
  %338 = vmatmul.bf16.gmra.mxu0 %v118
  %v339 = vpop.f32.mrf.mxu0
  %v340 = vadd.f32 %v162, %v339
  %v341 = vpop.f32.mrf.mxu0
  %v342 = vadd.f32 %v162, %v341
  %343 = vmatmul.bf16.gmra.mxu0 %v120
  %v344 = vpop.f32.mrf.mxu0
  %v345 = vadd.f32 %v162, %v344
  %v346 = vpop.f32.mrf.mxu0
  %v347 = vadd.f32 %v162, %v346
  %348 = vmatmul.bf16.gmra.mxu0 %v122
  %v349 = vpop.f32.mrf.mxu0
  %v350 = vadd.f32 %v162, %v349
  %v351 = vpop.f32.mrf.mxu0
  %v352 = vadd.f32 %v162, %v351
  %353 = vmatmul.bf16.gmra.mxu0 %v124
  %v354 = vpop.f32.mrf.mxu0
  %v355 = vadd.f32 %v162, %v354
  %v356 = vpop.f32.mrf.mxu0
  %v357 = vadd.f32 %v162, %v356
  %358 = vmatmul.bf16.gmra.mxu0 %v126
  %v359 = vpop.f32.mrf.mxu0
  %v360 = vadd.f32 %v162, %v359
  %v361 = vpop.f32.mrf.mxu0
  %v362 = vadd.f32 %v162, %v361
  %363 = vdwg.mxu0
  %364 = vmatpush.bf16.msra.mxu0 %v243
  %365 = vmatpush.bf16.msra.mxu0 %v242
  %366 = vmatpush.bf16.msra.mxu0 %v241
  %367 = vmatpush.bf16.msra.mxu0 %v240
  %368 = vmatpush.bf16.msra.mxu0 %v239
  %369 = vmatpush.bf16.msra.mxu0 %v238
  %370 = vmatpush.bf16.msra.mxu0 %v237
  %371 = vmatpush.bf16.msra.mxu0 %v236
  %372 = vmatmul.bf16.gmra.mxu0 %v91
  %v373 = vpop.f32.mrf.mxu0
  %v374 = vadd.f32 %v270, %v373
  %v375 = vpop.f32.mrf.mxu0
  %v376 = vadd.f32 %v272, %v375
  %377 = vmatmul.bf16.gmra.mxu0 %v93
  %v378 = vpop.f32.mrf.mxu0
  %v379 = vadd.f32 %v275, %v378
  %v380 = vpop.f32.mrf.mxu0
  %v381 = vadd.f32 %v277, %v380
  %382 = vmatmul.bf16.gmra.mxu0 %v95
  %v383 = vpop.f32.mrf.mxu0
  %v384 = vadd.f32 %v280, %v383
  %v385 = vpop.f32.mrf.mxu0
  %v386 = vadd.f32 %v282, %v385
  %387 = vmatmul.bf16.gmra.mxu0 %v97
  %v388 = vpop.f32.mrf.mxu0
  %v389 = vadd.f32 %v285, %v388
  %v390 = vpop.f32.mrf.mxu0
  %v391 = vadd.f32 %v287, %v390
  %392 = vmatmul.bf16.gmra.mxu0 %v99
  %v393 = vpop.f32.mrf.mxu0
  %v394 = vadd.f32 %v290, %v393
  %v395 = vpop.f32.mrf.mxu0
  %v396 = vadd.f32 %v292, %v395
  %397 = vmatmul.bf16.gmra.mxu0 %v101
  %v398 = vpop.f32.mrf.mxu0
  %v399 = vadd.f32 %v295, %v398
  %v400 = vpop.f32.mrf.mxu0
  %v401 = vadd.f32 %v297, %v400
  %402 = vmatmul.bf16.gmra.mxu0 %v103
  %v403 = vpop.f32.mrf.mxu0
  %v404 = vadd.f32 %v300, %v403
  %v405 = vpop.f32.mrf.mxu0
  %v406 = vadd.f32 %v302, %v405
  %407 = vmatmul.bf16.gmra.mxu0 %v105
  %v408 = vpop.f32.mrf.mxu0
  %v409 = vadd.f32 %v305, %v408
  %v410 = vpop.f32.mrf.mxu0
  %v411 = vadd.f32 %v307, %v410
  %412 = vmatmul.bf16.gmra.mxu0 %v107
  %v413 = vpop.f32.mrf.mxu0
  %v414 = vadd.f32 %v310, %v413
  %v415 = vpop.f32.mrf.mxu0
  %v416 = vadd.f32 %v312, %v415
  %417 = vmatmul.bf16.gmra.mxu0 %v109
  %v418 = vpop.f32.mrf.mxu0
  %v419 = vadd.f32 %v315, %v418
  %v420 = vpop.f32.mrf.mxu0
  %v421 = vadd.f32 %v317, %v420
  %422 = vmatmul.bf16.gmra.mxu0 %v111
  %v423 = vpop.f32.mrf.mxu0
  %v424 = vadd.f32 %v320, %v423
  %v425 = vpop.f32.mrf.mxu0
  %v426 = vadd.f32 %v322, %v425
  %427 = vmatmul.bf16.gmra.mxu0 %v113
  %v428 = vpop.f32.mrf.mxu0
  %v429 = vadd.f32 %v325, %v428
  %v430 = vpop.f32.mrf.mxu0
  %v431 = vadd.f32 %v327, %v430
  %432 = vmatmul.bf16.gmra.mxu0 %v115
  %v433 = vpop.f32.mrf.mxu0
  %v434 = vadd.f32 %v330, %v433
  %v435 = vpop.f32.mrf.mxu0
  %v436 = vadd.f32 %v332, %v435
  %437 = vmatmul.bf16.gmra.mxu0 %v117
  %v438 = vpop.f32.mrf.mxu0
  %v439 = vadd.f32 %v335, %v438
  %v440 = vpop.f32.mrf.mxu0
  %v441 = vadd.f32 %v337, %v440
  %442 = vmatmul.bf16.gmra.mxu0 %v119
  %v443 = vpop.f32.mrf.mxu0
  %v444 = vadd.f32 %v340, %v443
  %v445 = vpop.f32.mrf.mxu0
  %v446 = vadd.f32 %v342, %v445
  %447 = vmatmul.bf16.gmra.mxu0 %v121
  %v448 = vpop.f32.mrf.mxu0
  %v449 = vadd.f32 %v345, %v448
  %v450 = vpop.f32.mrf.mxu0
  %v451 = vadd.f32 %v347, %v450
  %452 = vmatmul.bf16.gmra.mxu0 %v123
  %v453 = vpop.f32.mrf.mxu0
  %v454 = vadd.f32 %v350, %v453
  %v455 = vpop.f32.mrf.mxu0
  %v456 = vadd.f32 %v352, %v455
  %457 = vmatmul.bf16.gmra.mxu0 %v125
  %v458 = vpop.f32.mrf.mxu0
  %v459 = vadd.f32 %v355, %v458
  %v460 = vpop.f32.mrf.mxu0
  %v461 = vadd.f32 %v357, %v460
  %462 = vmatmul.bf16.gmra.mxu0 %v127
  %v463 = vpop.f32.mrf.mxu0
  %v464 = vadd.f32 %v360, %v463
  %v465 = vpop.f32.mrf.mxu0
  %v466 = vadd.f32 %v362, %v465
  %467 = vdwg.mxu0
  %468 = vst [vmem:[%s3] sm:$0xff] %v374
  %469 = vst [vmem:[%s3 + $0x8] sm:$0xff] %v376
  %470 = vst [vmem:[%s3 + $0x10] sm:$0xff] %v379
  %471 = vst [vmem:[%s3 + $0x18] sm:$0xff] %v381
  %472 = vst [vmem:[%s3 + $0x20] sm:$0xff] %v384
  %473 = vst [vmem:[%s3 + $0x28] sm:$0xff] %v386
  %474 = vst [vmem:[%s3 + $0x30] sm:$0xff] %v389
  %475 = vst [vmem:[%s3 + $0x38] sm:$0xff] %v391
  %476 = vst [vmem:[%s3 + $0x40] sm:$0xff] %v394
  %477 = vst [vmem:[%s3 + $0x48] sm:$0xff] %v396
  %478 = vst [vmem:[%s3 + $0x50] sm:$0xff] %v399
  %479 = vst [vmem:[%s3 + $0x58] sm:$0xff] %v401
  %480 = vst [vmem:[%s3 + $0x60] sm:$0xff] %v404
  %481 = vst [vmem:[%s3 + $0x68] sm:$0xff] %v406
  %482 = vst [vmem:[%s3 + $0x70] sm:$0xff] %v409
  %483 = vst [vmem:[%s3 + $0x78] sm:$0xff] %v411
  %484 = vst [vmem:[%s3 + $0x80] sm:$0xff] %v414
  %485 = vst [vmem:[%s3 + $0x88] sm:$0xff] %v416
  %486 = vst [vmem:[%s3 + $0x90] sm:$0xff] %v419
  %487 = vst [vmem:[%s3 + $0x98] sm:$0xff] %v421
  %488 = vst [vmem:[%s3 + $0xa0] sm:$0xff] %v424
  %489 = vst [vmem:[%s3 + $0xa8] sm:$0xff] %v426
  %490 = vst [vmem:[%s3 + $0xb0] sm:$0xff] %v429
  %491 = vst [vmem:[%s3 + $0xb8] sm:$0xff] %v431
  %492 = vst [vmem:[%s3 + $0xc0] sm:$0xff] %v434
  %493 = vst [vmem:[%s3 + $0xc8] sm:$0xff] %v436
  %494 = vst [vmem:[%s3 + $0xd0] sm:$0xff] %v439
  %495 = vst [vmem:[%s3 + $0xd8] sm:$0xff] %v441
  %496 = vst [vmem:[%s3 + $0xe0] sm:$0xff] %v444
  %497 = vst [vmem:[%s3 + $0xe8] sm:$0xff] %v446
  %498 = vst [vmem:[%s3 + $0xf0] sm:$0xff] %v449
  %499 = vst [vmem:[%s3 + $0xf8] sm:$0xff] %v451
  %500 = vst [vmem:[%s3 + $0x100] sm:$0xff] %v454
  %501 = vst [vmem:[%s3 + $0x108] sm:$0xff] %v456
  %502 = vst [vmem:[%s3 + $0x110] sm:$0xff] %v459
  %503 = vst [vmem:[%s3 + $0x118] sm:$0xff] %v461
  %504 = vst [vmem:[%s3 + $0x120] sm:$0xff] %v464
  %505 = vst [vmem:[%s3 + $0x128] sm:$0xff] %v466
  // Predicated region
  $region14: #{fastrcnn_predictor.1} parent=0 // pred_check
    _
  $region15: #{fastrcnn_predictor.1} parent=0 // pred_check_branch
    %507 = sbr.rel (0) target = $region17
  $region16: #{fastrcnn_predictor.1} parent=0 // pred_region
    _
  $region17: #{fastrcnn_predictor.1} parent=0 // pred_fallthru
    _
  // Predicated region
  $region18: #{fastrcnn_predictor.1} parent=0 // pred_check
    _
  $region19: #{fastrcnn_predictor.1} parent=0 // pred_check_branch
    %509 = sbr.rel (0) target = $region21
  $region20: #{fastrcnn_predictor.1} parent=0 // pred_region
    _
  $region21: #{fastrcnn_predictor.1} parent=0 // pred_fallthru
    _

</llo_original>
